<compile_context>
chip_gen: v7x
topology: tpu7x:2x2x1
jax: 0.10.0
libtpu: 0.0.40
codegen_flags: <defaults>
</compile_context>

<pallas_src>
import functools

import jax
import jax.numpy as jnp
from jax import lax
from jax.experimental import pallas as pl
from jax.experimental.pallas import tpu as pltpu


def _sigmoid_eup(z):
    # exp -> EUP, approximate reciprocal -> EUP; keeps the VPU free for gating.
    return pl.reciprocal(1.0 + jnp.exp(-z), approx=True)


def _malconv_pool_kernel(xp_ref, halo_ref, wab_ref, wcd_ref, we_ref, bias_ref,
                         out_ref, stage_ref, *, block_l, e_dim, n_ch, l_out):
    """Fused conv1/conv2 + sigmoid gating + running global max for one tile.

    xp_ref:    (1, block_l, 2E)   stride-2 pairs  xp[m] = [x_emb[2m], x_emb[2m+1]]
    halo_ref:  (1, 1, 8, 2E)      the 8 xp rows following this tile (clamped)
    wab_ref:   (2E, 2*n_ch)       fused conv1|conv2 weights, taps (0, 1)
    wcd_ref:   (2E, 2*n_ch)       taps (2, 3)
    we_ref:    (E,  2*n_ch)       tap 4
    bias_ref:  (1,  2*n_ch)       fused conv1|conv2 bias (f32)
    out_ref:   (1, 1, n_ch)       running max of gated conv outputs (f32)
    stage_ref: (block_l + 8, 2E)  VMEM staging buffer (tile + halo, contiguous)
    """
    lt = pl.program_id(1)

    @pl.when(lt == 0)
    def _init():
        out_ref[...] = jnp.full(out_ref.shape, -jnp.inf, out_ref.dtype)

    # Stage tile + halo contiguously (both stores are sublane-aligned).
    xpb = xp_ref[...][0]            # (block_l, 2E)
    halo = halo_ref[...][0, 0]      # (8, 2E)
    stage_ref[pl.ds(0, block_l), :] = xpb
    stage_ref[pl.ds(block_l, 8), :] = halo
    full = stage_ref[...]           # (block_l + 8, 2E)

    # Output row j needs xp rows j, j+1, j+2:
    #   row j   -> taps (0, 1);  row j+1 -> taps (2, 3);  row j+2[:E] -> tap 4.
    c = jnp.dot(full[0:block_l, :], wab_ref[...],
                preferred_element_type=jnp.float32)
    c += jnp.dot(full[1:block_l + 1, :], wcd_ref[...],
                 preferred_element_type=jnp.float32)
    c += jnp.dot(full[2:block_l + 2, :e_dim], we_ref[...],
                 preferred_element_type=jnp.float32)
    c += bias_ref[...]                                 # single fused bias add

    gated = c[:, :n_ch] * _sigmoid_eup(c[:, n_ch:])    # (block_l, n_ch) f32

    # Mask rows past the true number of conv outputs (last tile / OOB padding).
    rows = lt * block_l + lax.broadcasted_iota(jnp.int32, (block_l, 1), 0)
    gated = jnp.where(rows < l_out, gated, -jnp.inf)

    tile_max = jnp.max(gated, axis=0, keepdims=True)   # (1, n_ch)
    out_ref[...] = jnp.maximum(out_ref[...], tile_max[None, :, :])


def malconv_pooled_features(x_ids, params, *, window_size=5, stride=2,
                            block_l=2048, conv_dtype=jnp.bfloat16):
    """Runs the Pallas kernel; returns pooled gated-conv features (B, 64)."""
    if window_size != 5 or stride != 2:
        raise NotImplementedError(
            "kernel is specialized for K=5, stride=2 (the MalConv defaults)")
    emb = params["embed"]                           # (VOCAB, E)
    w1, w2 = params["conv1_w"], params["conv2_w"]   # (64, E, K)
    n_ch, E, K = w1.shape
    B, L = x_ids.shape
    assert L >= K, "sequence shorter than the conv window"
    l_out = (L - K) // stride + 1                   # number of conv outputs

    if L % 2:                                       # pad to even length; padded
        x_ids = jnp.pad(x_ids, ((0, 0), (0, 1)))    # rows never feed valid outputs
        L += 1
    l_half = L // 2

    # Embedding gather (layout plumbing) + free reshape into stride-2 pairs.
    x_emb = emb[x_ids].astype(conv_dtype)           # (B, L, E)
    xp = x_emb.reshape(B, l_half, 2 * E)            # (B, L//2, 2E)

    # Lout tile size: multiple of 8, capped by block_l (VMEM sizing lever).
    tl = max(8, min(block_l, ((l_out + 7) // 8) * 8))
    n_tiles = pl.cdiv(l_out, tl)

    # 8-row halo following each tile (rows (t+1)*tl .. +7, clamped in range).
    halo_rows = (jnp.arange(n_tiles)[:, None] + 1) * tl + jnp.arange(8)[None, :]
    halo_rows = jnp.clip(halo_rows, 0, l_half - 1)
    halo = jnp.take(xp, halo_rows, axis=1)          # (B, n_tiles, 8, 2E)

    # Fused conv1|conv2 weights grouped by tap pairs (lane-dense 2*n_ch = 128).
    def tap(k):                                     # (E, 2*n_ch)
        return jnp.concatenate([w1[:, :, k].T, w2[:, :, k].T], axis=1)
    wab = jnp.concatenate([tap(0), tap(1)], axis=0).astype(conv_dtype)  # (2E,128)
    wcd = jnp.concatenate([tap(2), tap(3)], axis=0).astype(conv_dtype)  # (2E,128)
    we = tap(4).astype(conv_dtype)                                      # (E, 128)
    bias = jnp.concatenate([params["conv1_b"], params["conv2_b"]]
                           ).reshape(1, 2 * n_ch).astype(jnp.float32)

    kernel = functools.partial(_malconv_pool_kernel, block_l=tl, e_dim=E,
                               n_ch=n_ch, l_out=l_out)

    pooled = pl.pallas_call(
        kernel,
        out_shape=jax.ShapeDtypeStruct((B, 1, n_ch), jnp.float32),
        grid_spec=pltpu.PrefetchScalarGridSpec(
            num_scalar_prefetch=0,
            grid=(B, n_tiles),
            in_specs=[
                pl.BlockSpec((1, tl, 2 * E), lambda b, t: (b, t, 0)),
                pl.BlockSpec((1, 1, 8, 2 * E), lambda b, t: (b, t, 0, 0)),
                pl.BlockSpec((2 * E, 2 * n_ch), lambda b, t: (0, 0)),
                pl.BlockSpec((2 * E, 2 * n_ch), lambda b, t: (0, 0)),
                pl.BlockSpec((E, 2 * n_ch), lambda b, t: (0, 0)),
                pl.BlockSpec((1, 2 * n_ch), lambda b, t: (0, 0)),
            ],
            out_specs=pl.BlockSpec((1, 1, n_ch), lambda b, t: (b, 0, 0)),
            scratch_shapes=[pltpu.VMEM((tl + 8, 2 * E), conv_dtype)],
        ),
        compiler_params=pltpu.CompilerParams(
            dimension_semantics=("parallel", "arbitrary"),
            vmem_limit_bytes=32 * 1024 * 1024,
        ),
    )(xp, halo, wab, wcd, we, bias)

    return pooled.reshape(B, n_ch)


def malconv_forward(x_ids, params, *, window_size=5, stride=2,
                    block_l=2048, conv_dtype=jnp.bfloat16):
    pooled = malconv_pooled_features(
        x_ids, params, window_size=window_size, stride=stride,
        block_l=block_l, conv_dtype=conv_dtype)
    # Tiny fc head (64x64 + 64x1): once per call, not once per grid step.
    h = jax.nn.relu(pooled @ params["fc1_w"].T + params["fc1_b"])
    o = h @ params["fc2_w"].T + params["fc2_b"]
    return jax.nn.sigmoid(o)


# ----------------------------- plain-JAX reference -----------------------------

def _pooled_reference(x_ids, params, *, stride=2):
    x = jnp.transpose(params["embed"][x_ids], (0, 2, 1))     # (B, E, L) NCW

    def conv1d(x_ncw, w, b):
        out = lax.conv_general_dilated(
            x_ncw, w, window_strides=(stride,), padding="VALID",
            dimension_numbers=("NCH", "OIH", "NCH"))
        return out + b[None, :, None]

    c1 = conv1d(x, params["conv1_w"], params["conv1_b"])
    c2 = conv1d(x, params["conv2_w"], params["conv2_b"])
    gated = c1 * jax.nn.sigmoid(c2)                          # (B, 64, Lout)
    return jnp.max(gated, axis=2)                            # (B, 64)


def malconv_reference(x_ids, params, *, stride=2):
    pooled = _pooled_reference(x_ids, params, stride=stride)
    h = jax.nn.relu(pooled @ params["fc1_w"].T + params["fc1_b"])
    o = h @ params["fc2_w"].T + params["fc2_b"]
    return jax.nn.sigmoid(o)


def init_params(key, vocab=256, embedding_dim=8, window_size=5, output_dim=1):
    ks = jax.random.split(key, 9)
    E, K = embedding_dim, window_size
    s = 0.1
    return {
        "embed":   jax.random.normal(ks[0], (vocab, E), jnp.float32) * s,
        "conv1_w": jax.random.normal(ks[1], (64, E, K), jnp.float32) * s,
        "conv1_b": jax.random.normal(ks[2], (64,), jnp.float32) * s,
        "conv2_w": jax.random.normal(ks[3], (64, E, K), jnp.float32) * s,
        "conv2_b": jax.random.normal(ks[4], (64,), jnp.float32) * s,
        "fc1_w":   jax.random.normal(ks[5], (64, 64), jnp.float32) * s,
        "fc1_b":   jax.random.normal(ks[6], (64,), jnp.float32) * s,
        "fc2_w":   jax.random.normal(ks[7], (output_dim, 64), jnp.float32) * s,
        "fc2_b":   jax.random.normal(ks[8], (output_dim,), jnp.float32) * s,
    }


if __name__ == "__main__":
    key = jax.random.PRNGKey(0)
    pkey, xkey = jax.random.split(key)

    B, L, VOCAB = 2, 256, 256
    params = init_params(pkey, vocab=VOCAB)
    x_ids = jax.random.randint(xkey, (B, L), 0, VOCAB, dtype=jnp.int32)

    # Primary path: bf16 MXU operands, small tile to exercise multi-tile
    # pipelining, last-tile masking and the running-max accumulator.
    out = jax.block_until_ready(malconv_forward(x_ids, params, block_l=32))
    assert out.shape == (B, 1)

    # Tight check of the pooled features with f32 matmul operands (differences
    # are only accumulation order + the EUP approx-reciprocal sigmoid).
    pooled_f32 = jax.block_until_ready(
        malconv_pooled_features(x_ids, params, block_l=32,
                                conv_dtype=jnp.float32))
    pooled_ref = _pooled_reference(x_ids, params)
    assert float(jnp.max(jnp.abs(pooled_f32 - pooled_ref))) < 2e-3, \
        float(jnp.max(jnp.abs(pooled_f32 - pooled_ref)))

    # End-to-end check of the bf16 path against a bf16-quantized reference.
    q = lambda a: a.astype(jnp.bfloat16).astype(jnp.float32)
    params_q = dict(params, embed=q(params["embed"]),
                    conv1_w=q(params["conv1_w"]), conv2_w=q(params["conv2_w"]))
    ref = malconv_reference(x_ids, params_q)
    assert float(jnp.max(jnp.abs(out - ref))) < 5e-3, \
        float(jnp.max(jnp.abs(out - ref)))

    print("KERNEL_OK")
</pallas_src>

<mosaic_0001>
module attributes {stable_mosaic.version = 11 : i64} {
  func.func @_malconv_pool_kernel(%arg0: i32, %arg1: i32, %arg2: memref<1x32x16xbf16, #tpu.memory_space<vmem>>, %arg3: memref<1x1x8x16xbf16, #tpu.memory_space<vmem>>, %arg4: memref<16x128xbf16, #tpu.memory_space<vmem>>, %arg5: memref<16x128xbf16, #tpu.memory_space<vmem>>, %arg6: memref<8x128xbf16, #tpu.memory_space<vmem>>, %arg7: memref<1x128xf32, #tpu.memory_space<vmem>>, %arg8: memref<1x1x64xf32, #tpu.memory_space<vmem>>, %arg9: memref<40x16xbf16, #tpu.memory_space<vmem>>) attributes {dimension_semantics = [#tpu.dimension_semantics<parallel>, #tpu.dimension_semantics<arbitrary>], iteration_bounds = array<i64: 2, 4>, scalar_prefetch = 0 : i64, scratch_operands = 1 : i64, tpu.core_type = #tpu.core_type<tc>, window_params = [{transform_indices = @transform_0, window_bounds = array<i64: 1, 32, 16>}, {transform_indices = @transform_1, window_bounds = array<i64: 1, 1, 8, 16>}, {pipeline_mode = #tpu.pipeline_mode<synchronous>, transform_indices = @transform_2, window_bounds = array<i64: 16, 128>}, {pipeline_mode = #tpu.pipeline_mode<synchronous>, transform_indices = @transform_3, window_bounds = array<i64: 16, 128>}, {pipeline_mode = #tpu.pipeline_mode<synchronous>, transform_indices = @transform_4, window_bounds = array<i64: 8, 128>}, {pipeline_mode = #tpu.pipeline_mode<synchronous>, transform_indices = @transform_5, window_bounds = array<i64: 1, 128>}, {transform_indices = @transform_6, window_bounds = array<i64: 1, 1, 64>}]} {
    %c0_i32 = arith.constant 0 : i32
    %0 = arith.cmpi eq, %arg1, %c0_i32 : i32
    %1 = arith.extui %0 : i1 to i32
    %c0_i32_0 = arith.constant 0 : i32
    %2 = arith.cmpi ne, %1, %c0_i32_0 : i32
    scf.if %2 {
      %cst_32 = arith.constant 0xFF800000 : f32
      %49 = vector.broadcast %cst_32 : f32 to vector<1x1x64xf32>
      %c0_33 = arith.constant 0 : index
      %c0_34 = arith.constant 0 : index
      %c0_35 = arith.constant 0 : index
      %50 = vector.load %arg8[%c0_33, %c0_34, %c0_35] : memref<1x1x64xf32, #tpu.memory_space<vmem>>, vector<1x1x64xf32>
      tpu.vector_store %arg8[%c0_33, %c0_34, %c0_35], %49 {strides = array<i32>} : memref<1x1x64xf32, #tpu.memory_space<vmem>>, vector<1x1x64xf32>,
    } else {
    }
    %c0 = arith.constant 0 : index
    %c0_1 = arith.constant 0 : index
    %c0_2 = arith.constant 0 : index
    %3 = vector.load %arg2[%c0, %c0_1, %c0_2] : memref<1x32x16xbf16, #tpu.memory_space<vmem>>, vector<1x32x16xbf16>
    %4 = vector.shape_cast %3 : vector<1x32x16xbf16> to vector<32x16xbf16>
    %c0_3 = arith.constant 0 : index
    %c0_4 = arith.constant 0 : index
    %c0_5 = arith.constant 0 : index
    %c0_6 = arith.constant 0 : index
    %5 = vector.load %arg3[%c0_3, %c0_4, %c0_5, %c0_6] : memref<1x1x8x16xbf16, #tpu.memory_space<vmem>>, vector<1x1x8x16xbf16>
    %6 = vector.shape_cast %5 : vector<1x1x8x16xbf16> to vector<8x16xbf16>
    %c0_7 = arith.constant 0 : index
    %c0_8 = arith.constant 0 : index
    %7 = vector.load %arg9[%c0_7, %c0_8] : memref<40x16xbf16, #tpu.memory_space<vmem>>, vector<32x16xbf16>
    tpu.vector_store %arg9[%c0_7, %c0_8], %4 {strides = array<i32>} : memref<40x16xbf16, #tpu.memory_space<vmem>>, vector<32x16xbf16>,
    %c32 = arith.constant 32 : index
    %c0_9 = arith.constant 0 : index
    %8 = vector.load %arg9[%c32, %c0_9] : memref<40x16xbf16, #tpu.memory_space<vmem>>, vector<8x16xbf16>
    tpu.vector_store %arg9[%c32, %c0_9], %6 {strides = array<i32>} : memref<40x16xbf16, #tpu.memory_space<vmem>>, vector<8x16xbf16>,
    %c0_10 = arith.constant 0 : index
    %c0_11 = arith.constant 0 : index
    %9 = vector.load %arg9[%c0_10, %c0_11] : memref<40x16xbf16, #tpu.memory_space<vmem>>, vector<40x16xbf16>
    %10 = vector.extract_strided_slice %9 {offsets = [0, 0], sizes = [32, 16], strides = [1, 1]} : vector<40x16xbf16> to vector<32x16xbf16>
    %c0_12 = arith.constant 0 : index
    %c0_13 = arith.constant 0 : index
    %11 = vector.load %arg4[%c0_12, %c0_13] : memref<16x128xbf16, #tpu.memory_space<vmem>>, vector<16x128xbf16>
    %cst = arith.constant dense<0.000000e+00> : vector<32x128xf32>
    %12 = tpu.matmul %10, %11, %cst {dimension_numbers = #tpu.dot_dimension_numbers<[1], [0], [0], [1], [0, 0, 1, 1], [], []>} : vector<32x16xbf16>, vector<16x128xbf16>, vector<32x128xf32> -> vector<32x128xf32>
    %13 = vector.extract_strided_slice %9 {offsets = [1, 0], sizes = [32, 16], strides = [1, 1]} : vector<40x16xbf16> to vector<32x16xbf16>
    %c0_14 = arith.constant 0 : index
    %c0_15 = arith.constant 0 : index
    %14 = vector.load %arg5[%c0_14, %c0_15] : memref<16x128xbf16, #tpu.memory_space<vmem>>, vector<16x128xbf16>
    %cst_16 = arith.constant dense<0.000000e+00> : vector<32x128xf32>
    %15 = tpu.matmul %13, %14, %cst_16 {dimension_numbers = #tpu.dot_dimension_numbers<[1], [0], [0], [1], [0, 0, 1, 1], [], []>} : vector<32x16xbf16>, vector<16x128xbf16>, vector<32x128xf32> -> vector<32x128xf32>
    %16 = arith.addf %12, %15 : vector<32x128xf32>
    %17 = vector.extract_strided_slice %9 {offsets = [2, 0], sizes = [32, 8], strides = [1, 1]} : vector<40x16xbf16> to vector<32x8xbf16>
    %c0_17 = arith.constant 0 : index
    %c0_18 = arith.constant 0 : index
    %18 = vector.load %arg6[%c0_17, %c0_18] : memref<8x128xbf16, #tpu.memory_space<vmem>>, vector<8x128xbf16>
    %cst_19 = arith.constant dense<0.000000e+00> : vector<32x128xf32>
    %19 = tpu.matmul %17, %18, %cst_19 {dimension_numbers = #tpu.dot_dimension_numbers<[1], [0], [0], [1], [0, 0, 1, 1], [], []>} : vector<32x8xbf16>, vector<8x128xbf16>, vector<32x128xf32> -> vector<32x128xf32>
    %20 = arith.addf %16, %19 : vector<32x128xf32>
    %c0_20 = arith.constant 0 : index
    %c0_21 = arith.constant 0 : index
    %21 = vector.load %arg7[%c0_20, %c0_21] : memref<1x128xf32, #tpu.memory_space<vmem>>, vector<1x128xf32>
    %22 = vector.broadcast %21 : vector<1x128xf32> to vector<32x128xf32>
    %23 = arith.addf %20, %22 : vector<32x128xf32>
    %24 = vector.extract_strided_slice %23 {offsets = [0, 0], sizes = [32, 64], strides = [1, 1]} : vector<32x128xf32> to vector<32x64xf32>
    %25 = vector.extract_strided_slice %23 {offsets = [0, 64], sizes = [32, 64], strides = [1, 1]} : vector<32x128xf32> to vector<32x64xf32>
    %cst_22 = arith.constant 0.000000e+00 : f32
    %26 = vector.broadcast %cst_22 : f32 to vector<32x64xf32>
    %27 = arith.subf %26, %25 : vector<32x64xf32>
    %28 = math.exp %27 : vector<32x64xf32>
    %cst_23 = arith.constant 1.000000e+00 : f32
    %29 = vector.broadcast %cst_23 : f32 to vector<32x64xf32>
    %30 = arith.addf %29, %28 : vector<32x64xf32>
    %31 = tpu.reciprocal %30 {approx = true} : vector<32x64xf32> -> vector<32x64xf32>
    %32 = arith.mulf %24, %31 : vector<32x64xf32>
    %c32_i32 = arith.constant 32 : i32
    %33 = arith.muli %arg1, %c32_i32 : i32
    %34 = tpu.iota {dimensions = array<i32: 0>} : vector<32x1xi32>
    %35 = vector.broadcast %33 : i32 to vector<32x1xi32>
    %36 = arith.addi %35, %34 : vector<32x1xi32>
    %c126_i32 = arith.constant 126 : i32
    %37 = vector.broadcast %c126_i32 : i32 to vector<32x1xi32>
    %38 = arith.cmpi slt, %36, %37 : vector<32x1xi32>
    %cst_24 = arith.constant 0xFF800000 : f32
    %39 = vector.shape_cast %38 : vector<32x1xi1> to vector<32x1xi1>
    %40 = vector.broadcast %39 : vector<32x1xi1> to vector<32x64xi1>
    %41 = vector.broadcast %cst_24 : f32 to vector<32x64xf32>
    %42 = arith.select %40, %32, %41 : vector<32x64xi1>, vector<32x64xf32>
    %cst_25 = arith.constant dense<0xFF800000> : vector<64xf32>
    %43 = vector.multi_reduction <maximumf>, %42, %cst_25 [0] : vector<32x64xf32> to vector<64xf32>
    %44 = vector.shape_cast %43 : vector<64xf32> to vector<1x64xf32>
    %c0_26 = arith.constant 0 : index
    %c0_27 = arith.constant 0 : index
    %c0_28 = arith.constant 0 : index
    %45 = vector.load %arg8[%c0_26, %c0_27, %c0_28] : memref<1x1x64xf32, #tpu.memory_space<vmem>>, vector<1x1x64xf32>
    %46 = vector.shape_cast %44 : vector<1x64xf32> to vector<1x1x64xf32>
    %47 = arith.maximumf %45, %46 : vector<1x1x64xf32>
    %c0_29 = arith.constant 0 : index
    %c0_30 = arith.constant 0 : index
    %c0_31 = arith.constant 0 : index
    %48 = vector.load %arg8[%c0_29, %c0_30, %c0_31] : memref<1x1x64xf32, #tpu.memory_space<vmem>>, vector<1x1x64xf32>
    tpu.vector_store %arg8[%c0_29, %c0_30, %c0_31], %47 {strides = array<i32>} : memref<1x1x64xf32, #tpu.memory_space<vmem>>, vector<1x1x64xf32>,
    return
  }
  func.func @transform_0(%arg0: i32, %arg1: i32) -> (i32, i32, i32) {
    %c0_i32 = arith.constant 0 : i32
    %c0_i32_0 = arith.constant 0 : i32
    return %arg0, %arg1, %c0_i32 : i32, i32, i32
  }
  func.func @transform_1(%arg0: i32, %arg1: i32) -> (i32, i32, i32, i32) {
    %c0_i32 = arith.constant 0 : i32
    %c0_i32_0 = arith.constant 0 : i32
    %c0_i32_1 = arith.constant 0 : i32
    return %arg0, %arg1, %c0_i32, %c0_i32_0 : i32, i32, i32, i32
  }
  func.func @transform_2(%arg0: i32, %arg1: i32) -> (i32, i32) {
    %c0_i32 = arith.constant 0 : i32
    %c0_i32_0 = arith.constant 0 : i32
    %c0_i32_1 = arith.constant 0 : i32
    return %c0_i32, %c0_i32_0 : i32, i32
  }
  func.func @transform_3(%arg0: i32, %arg1: i32) -> (i32, i32) {
    %c0_i32 = arith.constant 0 : i32
    %c0_i32_0 = arith.constant 0 : i32
    %c0_i32_1 = arith.constant 0 : i32
    return %c0_i32, %c0_i32_0 : i32, i32
  }
  func.func @transform_4(%arg0: i32, %arg1: i32) -> (i32, i32) {
    %c0_i32 = arith.constant 0 : i32
    %c0_i32_0 = arith.constant 0 : i32
    %c0_i32_1 = arith.constant 0 : i32
    return %c0_i32, %c0_i32_0 : i32, i32
  }
  func.func @transform_5(%arg0: i32, %arg1: i32) -> (i32, i32) {
    %c0_i32 = arith.constant 0 : i32
    %c0_i32_0 = arith.constant 0 : i32
    %c0_i32_1 = arith.constant 0 : i32
    return %c0_i32, %c0_i32_0 : i32, i32
  }
  func.func @transform_6(%arg0: i32, %arg1: i32) -> (i32, i32, i32) {
    %c0_i32 = arith.constant 0 : i32
    %c0_i32_0 = arith.constant 0 : i32
    %c0_i32_1 = arith.constant 0 : i32
    return %arg0, %c0_i32, %c0_i32_0 : i32, i32, i32
  }
}

</mosaic_0001>

<llo_original>
// kernel: tpu_custom_call.1
$region0: #{tpu_custom_call.1}
  #allocation0 [shape = 'u32[]', space=smem, size = 0x4, offset = 0x4, fixed_abs, tag = 'smem constant byte address 0x4 - core index']
  #allocation1 [shape = 'u32[144,128]{1,0:T(1,128)}', space=vmem, size = 0x12000, scoped, tag = 'internal scratch']
  #allocation2 [shape = 'bf16[40,16]{1,0:T(8,128)(2,1)}', space=vmem, size = 0x2800, scoped, tag = 'scratch operand']
  %s0 = inlined_call_operand.vmem [shape: bf16[2,128,16], index: 0, kind: input, shape index: {}]
  %s1 = inlined_call_operand.vmem [shape: bf16[2,4,8,16], index: 1, kind: input, shape index: {}]
  %s2 = inlined_call_operand.vmem [shape: bf16[16,128], index: 2, kind: input, shape index: {}]
  %s3 = inlined_call_operand.vmem [shape: bf16[16,128], index: 3, kind: input, shape index: {}]
  %s4 = inlined_call_operand.vmem [shape: bf16[8,128], index: 4, kind: input, shape index: {}]
  %s5 = inlined_call_operand.vmem [shape: f32[1,128], index: 5, kind: input, shape index: {}]
  %s6 = inlined_call_operand.hbm [shape: f32[2,1,64], index: 6, kind: output, shape index: {}]
  %s7 = sld [smem:[#allocation0]]
  $region61: #{tpu_custom_call.1} parent=0
    _
  %s9 = ssub.s32 1, %s7
  %s10 = scalar_select 0, %s9, %s7
  $region1: #{tpu_custom_call.1} parent=0
    #allocation3 [shape = 'u8[1024]{0}', space=vmem, size = 0x400, scoped, tag = 'output window, operand 0']
    #allocation4 [shape = 's32[2]{0}', space=sflag, size = 0x8, scoped, tag = 'scoped memory for tpu_custom_call.1']
    %11 = vsyncpa [#allocation4], 0
    %s12 = scalar_lea.sflag [#allocation4], 1
    %13 = vsyncpa %s12, 0
    loop: start=0, step=1, limit=10
    $region2: #{tpu_custom_call.1} parent=1 // loop_pre_header
      _
    $region3: #{tpu_custom_call.1} parent=1 // loop_header
      %s15 = sphi 0, %s19
      %p16 = scmp.ge.s32.totalorder %s15, 10
      %s22 = sphi 0, %s34
      %s23 = sphi 0, %s30
      %s24 = sphi 0, %s22
      %s25 = sphi 0, %s23
      %s26 = sphi 0, %s24
      %s27 = sphi 0, %s25
      %s39 = sphi 0, %s41
      %s42 = sphi 0, %s39
      %s43 = sphi 0, %s42
      %s59 = sphi 0, %s43
      %s67 = sphi 0, %s69
      %s70 = sphi 0, %s67
      %s71 = sphi 0, %s70
      %s87 = sphi 0, %s71
      %s91 = sphi 0, %s91
      %s93 = sphi 0, %s91
      %s94 = sphi 0, %s93
      %s108 = sphi 0, %s94
      %s112 = sphi 0, %s112
      %s114 = sphi 0, %s112
      %s115 = sphi 0, %s114
      %s129 = sphi 0, %s115
      %s133 = sphi 0, %s133
      %s135 = sphi 0, %s133
      %s136 = sphi 0, %s135
      %s150 = sphi 0, %s136
      %s154 = sphi 0, %s154
      %s156 = sphi 0, %s154
      %s157 = sphi 0, %s156
      %s171 = sphi 0, %s157
      %s177 = sphi 0, %s179
      %s180 = sphi 0, %s177
      %s181 = sphi 0, %s180
      %s197 = sphi 0, %s181
    $region4: #{tpu_custom_call.1} parent=1 // loop_header_branch
      %18 = sbr.rel (%p16) target = $region8
    $region5: #{tpu_custom_call.1} parent=1 // loop_body
      %s20 = ssub.s32 %s15, 1
      %s21 = ssub.s32 %s15, 2
      %s28 = sadd.s32 1, %s23
      %p29 = scmp.ge.s32.totalorder %s28, 4
      %s30 = scalar_select %p29, 0, %s28
      %s31 = sadd.s32 1, %s22
      %s32 = scalar_select %p29, %s31, %s22
      %p33 = scmp.ge.s32.totalorder %s32, 2
      %s34 = scalar_select %p33, 0, %s32
      %s35 = ssub.s32 %s22, %s34
      %s36 = ssub.s32 %s23, %s30
      %s37 = sor.u32 %s35, %s36
      %p38 = scmp.eq.s32.totalorder %s37, 0
      %s40 = sadd.s32 %s39, 1
      %s41 = scalar_select %p38, %s39, %s40
      %p44 = pneg %p38
      %p45 = scmp.eq.s32.totalorder %s15, 7
      %p46 = por %p44, %p45
      %p47 = scmp.ne.s32.totalorder %s39, %s42
      %p48 = scmp.eq.s32.totalorder %s15, 0
      %p49 = por %p47, %p48
      %p50 = scmp.ne.s32.totalorder %s39, %s42
      %p51 = scmp.eq.s32.totalorder %s20, 7
      %p52 = por %p50, %p51
      %p53 = scmp.ne.s32.totalorder %s42, %s43
      %p54 = scmp.eq.s32.totalorder %s20, 0
      %p55 = por %p53, %p54
      %p56 = scmp.ne.s32.totalorder %s42, %s43
      %p57 = scmp.eq.s32.totalorder %s21, 7
      %p58 = por %p56, %p57
      %p60 = scmp.ne.s32.totalorder %s43, %s59
      %p61 = scmp.eq.s32.totalorder %s21, 0
      %p62 = por %p60, %p61
      %s63 = ssub.s32 %s22, %s34
      %s64 = ssub.s32 %s23, %s30
      %s65 = sor.u32 %s63, %s64
      %p66 = scmp.eq.s32.totalorder %s65, 0
      %s68 = sadd.s32 %s67, 1
      %s69 = scalar_select %p66, %s67, %s68
      %p72 = pneg %p66
      %p73 = scmp.eq.s32.totalorder %s15, 7
      %p74 = por %p72, %p73
      %p75 = scmp.ne.s32.totalorder %s67, %s70
      %p76 = scmp.eq.s32.totalorder %s15, 0
      %p77 = por %p75, %p76
      %p78 = scmp.ne.s32.totalorder %s67, %s70
      %p79 = scmp.eq.s32.totalorder %s20, 7
      %p80 = por %p78, %p79
      %p81 = scmp.ne.s32.totalorder %s70, %s71
      %p82 = scmp.eq.s32.totalorder %s20, 0
      %p83 = por %p81, %p82
      %p84 = scmp.ne.s32.totalorder %s70, %s71
      %p85 = scmp.eq.s32.totalorder %s21, 7
      %p86 = por %p84, %p85
      %p88 = scmp.ne.s32.totalorder %s71, %s87
      %p89 = scmp.eq.s32.totalorder %s21, 0
      %p90 = por %p88, %p89
      %s92 = sadd.s32 %s91, 1
      %p95 = scmp.eq.s32.totalorder %s15, 7
      %p96 = scmp.ne.s32.totalorder %s91, %s93
      %p97 = scmp.eq.s32.totalorder %s15, 0
      %p98 = por %p96, %p97
      %p99 = scmp.ne.s32.totalorder %s91, %s93
      %p100 = scmp.eq.s32.totalorder %s20, 7
      %p101 = por %p99, %p100
      %p102 = scmp.ne.s32.totalorder %s93, %s94
      %p103 = scmp.eq.s32.totalorder %s20, 0
      %p104 = por %p102, %p103
      %p105 = scmp.ne.s32.totalorder %s93, %s94
      %p106 = scmp.eq.s32.totalorder %s21, 7
      %p107 = por %p105, %p106
      %p109 = scmp.ne.s32.totalorder %s94, %s108
      %p110 = scmp.eq.s32.totalorder %s21, 0
      %p111 = por %p109, %p110
      %s113 = sadd.s32 %s112, 1
      %p116 = scmp.eq.s32.totalorder %s15, 7
      %p117 = scmp.ne.s32.totalorder %s112, %s114
      %p118 = scmp.eq.s32.totalorder %s15, 0
      %p119 = por %p117, %p118
      %p120 = scmp.ne.s32.totalorder %s112, %s114
      %p121 = scmp.eq.s32.totalorder %s20, 7
      %p122 = por %p120, %p121
      %p123 = scmp.ne.s32.totalorder %s114, %s115
      %p124 = scmp.eq.s32.totalorder %s20, 0
      %p125 = por %p123, %p124
      %p126 = scmp.ne.s32.totalorder %s114, %s115
      %p127 = scmp.eq.s32.totalorder %s21, 7
      %p128 = por %p126, %p127
      %p130 = scmp.ne.s32.totalorder %s115, %s129
      %p131 = scmp.eq.s32.totalorder %s21, 0
      %p132 = por %p130, %p131
      %s134 = sadd.s32 %s133, 1
      %p137 = scmp.eq.s32.totalorder %s15, 7
      %p138 = scmp.ne.s32.totalorder %s133, %s135
      %p139 = scmp.eq.s32.totalorder %s15, 0
      %p140 = por %p138, %p139
      %p141 = scmp.ne.s32.totalorder %s133, %s135
      %p142 = scmp.eq.s32.totalorder %s20, 7
      %p143 = por %p141, %p142
      %p144 = scmp.ne.s32.totalorder %s135, %s136
      %p145 = scmp.eq.s32.totalorder %s20, 0
      %p146 = por %p144, %p145
      %p147 = scmp.ne.s32.totalorder %s135, %s136
      %p148 = scmp.eq.s32.totalorder %s21, 7
      %p149 = por %p147, %p148
      %p151 = scmp.ne.s32.totalorder %s136, %s150
      %p152 = scmp.eq.s32.totalorder %s21, 0
      %p153 = por %p151, %p152
      %s155 = sadd.s32 %s154, 1
      %p158 = scmp.eq.s32.totalorder %s15, 7
      %p159 = scmp.ne.s32.totalorder %s154, %s156
      %p160 = scmp.eq.s32.totalorder %s15, 0
      %p161 = por %p159, %p160
      %p162 = scmp.ne.s32.totalorder %s154, %s156
      %p163 = scmp.eq.s32.totalorder %s20, 7
      %p164 = por %p162, %p163
      %p165 = scmp.ne.s32.totalorder %s156, %s157
      %p166 = scmp.eq.s32.totalorder %s20, 0
      %p167 = por %p165, %p166
      %p168 = scmp.ne.s32.totalorder %s156, %s157
      %p169 = scmp.eq.s32.totalorder %s21, 7
      %p170 = por %p168, %p169
      %p172 = scmp.ne.s32.totalorder %s157, %s171
      %p173 = scmp.eq.s32.totalorder %s21, 0
      %p174 = por %p172, %p173
      %s175 = ssub.s32 %s22, %s34
      %p176 = scmp.eq.s32.totalorder %s175, 0
      %s178 = sadd.s32 %s177, 1
      %s179 = scalar_select %p176, %s177, %s178
      %p182 = pneg %p176
      %p183 = scmp.eq.s32.totalorder %s15, 7
      %p184 = por %p182, %p183
      %p185 = scmp.ne.s32.totalorder %s177, %s180
      %p186 = scmp.eq.s32.totalorder %s15, 0
      %p187 = por %p185, %p186
      %p188 = scmp.ne.s32.totalorder %s177, %s180
      %p189 = scmp.eq.s32.totalorder %s20, 7
      %p190 = por %p188, %p189
      %p191 = scmp.ne.s32.totalorder %s180, %s181
      %p192 = scmp.eq.s32.totalorder %s20, 0
      %p193 = por %p191, %p192
      %p194 = scmp.ne.s32.totalorder %s180, %s181
      %p195 = scmp.eq.s32.totalorder %s21, 7
      %p196 = por %p194, %p195
      %p198 = scmp.ne.s32.totalorder %s181, %s197
      %p199 = scmp.eq.s32.totalorder %s21, 0
      %p200 = por %p198, %p199
      %p201 = scmp.le.s32.totalorder 1, %s15
      %p202 = scmp.lt.s32.totalorder %s15, 9
      %p203 = pnand %p201, %p202
      %p204 = pneg %p203
      // Predicated region
      $region9: #{tpu_custom_call.1} parent=5 // pred_check
        _
      $region10: #{tpu_custom_call.1} parent=5 // pred_check_branch
        %206 = sbr.rel (%p203) target = $region12
      $region11: #{tpu_custom_call.1} parent=5 // pred_region
        %s207 = ssub.s32 %s15, 1
        // Predicated region
        $region13: #{tpu_custom_call.1} parent=11 // pred_check
          %p208 = pneg %p104
        $region14: #{tpu_custom_call.1} parent=11 // pred_check_branch
          %210 = sbr.rel (%p208) target = $region16
        $region15: #{tpu_custom_call.1} parent=11 // pred_region
          _
        $region16: #{tpu_custom_call.1} parent=11 // pred_fallthru
          _
        // Predicated region
        $region17: #{tpu_custom_call.1} parent=11 // pred_check
          %p211 = pneg %p125
        $region18: #{tpu_custom_call.1} parent=11 // pred_check_branch
          %213 = sbr.rel (%p211) target = $region20
        $region19: #{tpu_custom_call.1} parent=11 // pred_region
          _
        $region20: #{tpu_custom_call.1} parent=11 // pred_fallthru
          _
        // Predicated region
        $region21: #{tpu_custom_call.1} parent=11 // pred_check
          %p214 = pneg %p146
        $region22: #{tpu_custom_call.1} parent=11 // pred_check_branch
          %216 = sbr.rel (%p214) target = $region24
        $region23: #{tpu_custom_call.1} parent=11 // pred_region
          _
        $region24: #{tpu_custom_call.1} parent=11 // pred_fallthru
          _
        // Predicated region
        $region25: #{tpu_custom_call.1} parent=11 // pred_check
          %p217 = pneg %p167
        $region26: #{tpu_custom_call.1} parent=11 // pred_check_branch
          %219 = sbr.rel (%p217) target = $region28
        $region27: #{tpu_custom_call.1} parent=11 // pred_region
          _
        $region28: #{tpu_custom_call.1} parent=11 // pred_fallthru
          _
      $region12: #{tpu_custom_call.1} parent=5 // pred_fallthru
        _
      %p220 = scmp.lt.s32.totalorder %s15, 8
      // Predicated region
      $region29: #{tpu_custom_call.1} parent=5 // pred_check
        %p221 = pneg %p220
      $region30: #{tpu_custom_call.1} parent=5 // pred_check_branch
        %223 = sbr.rel (%p221) target = $region32
      $region31: #{tpu_custom_call.1} parent=5 // pred_region
        // Predicated region
        $region33: #{tpu_custom_call.1} parent=31 // pred_check
          %p224 = pneg %p49
        $region34: #{tpu_custom_call.1} parent=31 // pred_check_branch
          %226 = sbr.rel (%p224) target = $region36
        $region35: #{tpu_custom_call.1} parent=31 // pred_region
          %s227 = smul.u32 4, %s23
          %p228 = scmp.lt.s32.totalorder %s22, 1
          %s229 = scalar_select %p228, %s22, 1
          %p230 = scmp.lt.s32.totalorder %s227, 15
          %s231 = scalar_select %p230, %s227, 15
          %s232 = smul.addr %s229, 16
          %s233 = sadd.s32 %s231, %s232
          %s234 = smul.addr %s233, 4
          %s235 = scalar_lea.vmem %s0, %s234
          %s236 = smul.u32 4, %s23
        $region36: #{tpu_custom_call.1} parent=31 // pred_fallthru
          _
        // Predicated region
        $region37: #{tpu_custom_call.1} parent=31 // pred_check
          %p237 = pneg %p77
        $region38: #{tpu_custom_call.1} parent=31 // pred_check_branch
          %239 = sbr.rel (%p237) target = $region40
        $region39: #{tpu_custom_call.1} parent=31 // pred_region
          %p240 = scmp.lt.s32.totalorder %s22, 1
          %s241 = scalar_select %p240, %s22, 1
          %p242 = scmp.lt.s32.totalorder %s23, 3
          %s243 = scalar_select %p242, %s23, 3
          %s244 = smul.addr %s241, 4
          %s245 = sadd.s32 %s243, %s244
          %s246 = smul.addr %s245, 4
          %s247 = scalar_lea.vmem %s1, %s246
        $region40: #{tpu_custom_call.1} parent=31 // pred_fallthru
          _
      $region32: #{tpu_custom_call.1} parent=5 // pred_fallthru
        _
      %p248 = scmp.le.s32.totalorder 1, %s15
      %p249 = scmp.lt.s32.totalorder %s15, 9
      %p250 = pnand %p248, %p249
      %p251 = pneg %p250
      // Predicated region
      $region41: #{tpu_custom_call.1} parent=5 // pred_check
        _
      $region42: #{tpu_custom_call.1} parent=5 // pred_check_branch
        %253 = sbr.rel (%p250) target = $region44
      $region43: #{tpu_custom_call.1} parent=5 // pred_region
        %s254 = ssub.s32 %s15, 1
        %s255 = smul.u32 4, %s25
        %p256 = scmp.lt.s32.totalorder %s24, 1
        %s257 = scalar_select %p256, %s24, 1
        %p258 = scmp.lt.s32.totalorder %s255, 15
        %s259 = scalar_select %p258, %s255, 15
        %s260 = smul.addr %s257, 16
        %s261 = sadd.s32 %s259, %s260
        %s262 = smul.addr %s261, 4
        %s263 = scalar_lea.vmem %s0, %s262
        %p264 = pneg %p55
        %p265 = pneg %p52
        %p266 = scmp.lt.s32.totalorder %s24, 1
        %s267 = scalar_select %p266, %s24, 1
        %p268 = scmp.lt.s32.totalorder %s25, 3
        %s269 = scalar_select %p268, %s25, 3
        %s270 = smul.addr %s267, 4
        %s271 = sadd.s32 %s269, %s270
        %s272 = smul.addr %s271, 4
        %s273 = scalar_lea.vmem %s1, %s272
        %p274 = pneg %p83
        %p275 = pneg %p80
        %p276 = pneg %p104
        %p277 = pneg %p101
        %p278 = pneg %p125
        %p279 = pneg %p122
        %p280 = pneg %p146
        %p281 = pneg %p143
        %p282 = pneg %p167
        %p283 = pneg %p164
        %p284 = pneg %p193
        %p285 = pneg %p190
        %s286 = sand.u32 %s180, 1
        %s287 = scalar_lea.sflag [#allocation4], %s286
        %s288 = sand.u32 %s180, 1
        %s289 = scalar_lea.vmem [#allocation3], %s288
        %s290 = smul.u32 4, %s25
        %p291 = scmp.lt.s32.totalorder %s24, 1
        %s292 = scalar_select %p291, %s24, 1
        %p293 = scmp.lt.s32.totalorder %s290, 15
        %s294 = scalar_select %p293, %s290, 15
        %s295 = smul.addr %s292, 16
        %s296 = sadd.s32 %s294, %s295
        %s297 = smul.addr %s296, 4
        %s298 = scalar_lea.vmem %s0, %s297
        %s299 = smul.u32 4, %s25
        %p300 = scmp.lt.s32.totalorder %s24, 1
        %s301 = scalar_select %p300, %s24, 1
        %p302 = scmp.lt.s32.totalorder %s25, 3
        %s303 = scalar_select %p302, %s25, 3
        %s304 = smul.addr %s301, 4
        %s305 = sadd.s32 %s303, %s304
        %s306 = smul.addr %s305, 4
        %s307 = scalar_lea.vmem %s1, %s306
        %p309 = scmp.eq.s32.totalorder %s25, 0
        // Predicated region
        $region45: #{tpu_custom_call.1} parent=43 // pred_check
          %p310 = pneg %p309
        $region46: #{tpu_custom_call.1} parent=43 // pred_check_branch
          %312 = sbr.rel (%p310) target = $region48
        $region47: #{tpu_custom_call.1} parent=43 // pred_region
          %vm313 = vcmask 516096
          %314 = vst.msk [vmem:[%s289] sm:$0x1] %vm313, -inf
        $region48: #{tpu_custom_call.1} parent=43 // pred_fallthru
          _
        %v315 = vld [vmem:[%s298] sm:$0xf]
        %v316 = vld [vmem:[%s298 + $0x4] sm:$0xf]
        %v317 = vld [vmem:[%s298 + $0x8] sm:$0xf]
        %v318 = vld [vmem:[%s298 + $0xc] sm:$0xf]
        %v319 = vld [vmem:[%s307] sm:$0xf]
        %vm320 = vcmask 125952
        %321 = vst.msk [vmem:[#allocation2] sm:$0xf] %vm320, %v315
        %322 = vst.msk [vmem:[#allocation2 + $0x4] sm:$0xf] %vm320, %v316
        %323 = vst.msk [vmem:[#allocation2 + $0x8] sm:$0xf] %vm320, %v317
        %324 = vst.msk [vmem:[#allocation2 + $0xc] sm:$0xf] %vm320, %v318
        %325 = vst.msk [vmem:[#allocation2 + $0x10] sm:$0xf] %vm320, %v319
        %v326 = vld [vmem:[#allocation2] sm:$0xf]
        %v327 = vld [vmem:[#allocation2 + $0x4] sm:$0xf]
        %v328 = vld [vmem:[#allocation2 + $0x8] sm:$0xf]
        %v329 = vld [vmem:[#allocation2 + $0xc] sm:$0xf]
        %v330 = vld [vmem:[#allocation2 + $0x10] sm:$0xf]
        %v331 = vld [vmem:[%s2] sm:$0xf]
        %v332 = vld [vmem:[%s2 + $0x4] sm:$0xf]
        %v333 = vld [vmem:[%s3] sm:$0xf]
        %v334 = vld [vmem:[%s3 + $0x4] sm:$0xf]
        %v340 = vunpack.c.l.b16 %v326
        %v341 = vunpack.c.l.b16 %v327
        %v342 = vunpack.c.l.b16 %v328
        %v343 = vunpack.c.l.b16 %v329
        %v344 = vunpack.c.l.b16 %v330
        %v345 = vpack.c.b16 %v341, %v340
        %v346 = vpack.c.b16 %v343, %v342
        %v347 = vpack.c.b16 %v344, %v344
        %vm348 = vsmask.f32 7424
        %v350 = vshrl.u32 %v345, 16
        %v352 = vshll.u32 %v345, 16
        %v354 = vrot.slane %v352, 1
        %v355 = vor.u32 %v350, %v354
        %v357 = vshll.u32 %v346, 16
        %v359 = vrot.slane %v357, 1
        %v360 = vsel %vm348, %v355, %v359
        %v361 = vshrl.u32 %v346, 16
        %v363 = vor.u32 %v361, %v359
        %v365 = vshll.u32 %v347, 16
        %v367 = vrot.slane %v365, 1
        %v368 = vsel %vm348, %v363, %v367
        %v371 = vunpack.c.l.b16 %v333
        %v372 = vunpack.c.l.b16 %v334
        %v373 = vpack.c.b16 %v372, %v371
        %vm375 = vcmask 130048
        %v377 = vsel %vm375, %v360, 0
        %v380 = vsel %vm375, %v368, 0
        %382 = vmatprep.subr.bf16.mxu0 0
        %383 = vmatpush1.bf16.msra.mxu0 %v373
        %384 = vmatprep.subr.bf16.mxu0 0
        %385 = vmatpush1.bf16.msra.mxu0 0
        %386 = vmatprep.subr.bf16.mxu0 0
        %387 = vmatpush1.bf16.msra.mxu0 0
        %388 = vmatprep.subr.bf16.mxu0 0
        %389 = vmatpush1.bf16.msra.mxu0 0
        %390 = vmatprep.subr.bf16.mxu0 0
        %391 = vmatpush1.bf16.msra.mxu0 0
        %392 = vmatprep.subr.bf16.mxu0 0
        %393 = vmatpush1.bf16.msra.mxu0 0
        %394 = vmatprep.subr.bf16.mxu0 0
        %395 = vmatpush1.bf16.msra.mxu0 0
        %396 = vmatprep.subr.bf16.mxu0 0
        %397 = vmatpush1.bf16.msra.mxu0 0
        %398 = vmatprep.subr.bf16.mxu0 0
        %399 = vmatpush1.bf16.msra.mxu0 0
        %400 = vmatprep.subr.bf16.mxu0 0
        %401 = vmatpush1.bf16.msra.mxu0 0
        %402 = vmatprep.subr.bf16.mxu0 0
        %403 = vmatpush1.bf16.msra.mxu0 0
        %404 = vmatprep.subr.bf16.mxu0 0
        %405 = vmatpush1.bf16.msra.mxu0 0
        %406 = vmatprep.subr.bf16.mxu0 0
        %407 = vmatpush1.bf16.msra.mxu0 0
        %408 = vmatprep.subr.bf16.mxu0 0
        %409 = vmatpush1.bf16.msra.mxu0 0
        %410 = vmatprep.subr.bf16.mxu0 0
        %411 = vmatpush1.bf16.msra.mxu0 0
        %412 = vmatprep.subr.bf16.mxu0 0
        %413 = vmatpush1.bf16.msra.mxu0 0
        %414 = vmatprep.mubr.bf16.mxu0 0
        %415 = vmatmul.mubr.bf16.gmra.mrb[0].mxu0 %v377
        %v416 = vpop.f32.mrb[0].mxu0
        %v417 = vadd.f32 0.0, %v416
        %v418 = vpop.f32.mrb[0].mxu0
        %v419 = vpop.f32.mrb[0].mxu0
        %v420 = vadd.f32 0.0, %v419
        %v421 = vpop.f32.mrb[0].mxu0
        %422 = vmatprep.mubr.bf16.mxu0 0
        %423 = vmatmul.mubr.bf16.gmra.mrb[0].mxu0 %v380
        %v424 = vpop.f32.mrb[0].mxu0
        %v425 = vadd.f32 0.0, %v424
        %v426 = vpop.f32.mrb[0].mxu0
        %v427 = vpop.f32.mrb[0].mxu0
        %v428 = vadd.f32 0.0, %v427
        %v429 = vpop.f32.mrb[0].mxu0
        %430 = vdwg.mxu0
        %v433 = vunpack.c.l.b16 %v331
        %v434 = vunpack.c.l.b16 %v332
        %v435 = vpack.c.b16 %v434, %v433
        %v437 = vsel %vm375, %v345, 0
        %v439 = vsel %vm375, %v346, 0
        %441 = vmatprep.subr.bf16.mxu0 0
        %442 = vmatpush1.bf16.msra.mxu0 %v435
        %443 = vmatprep.subr.bf16.mxu0 0
        %444 = vmatpush1.bf16.msra.mxu0 0
        %445 = vmatprep.subr.bf16.mxu0 0
        %446 = vmatpush1.bf16.msra.mxu0 0
        %447 = vmatprep.subr.bf16.mxu0 0
        %448 = vmatpush1.bf16.msra.mxu0 0
        %449 = vmatprep.subr.bf16.mxu0 0
        %450 = vmatpush1.bf16.msra.mxu0 0
        %451 = vmatprep.subr.bf16.mxu0 0
        %452 = vmatpush1.bf16.msra.mxu0 0
        %453 = vmatprep.subr.bf16.mxu0 0
        %454 = vmatpush1.bf16.msra.mxu0 0
        %455 = vmatprep.subr.bf16.mxu0 0
        %456 = vmatpush1.bf16.msra.mxu0 0
        %457 = vmatprep.subr.bf16.mxu0 0
        %458 = vmatpush1.bf16.msra.mxu0 0
        %459 = vmatprep.subr.bf16.mxu0 0
        %460 = vmatpush1.bf16.msra.mxu0 0
        %461 = vmatprep.subr.bf16.mxu0 0
        %462 = vmatpush1.bf16.msra.mxu0 0
        %463 = vmatprep.subr.bf16.mxu0 0
        %464 = vmatpush1.bf16.msra.mxu0 0
        %465 = vmatprep.subr.bf16.mxu0 0
        %466 = vmatpush1.bf16.msra.mxu0 0
        %467 = vmatprep.subr.bf16.mxu0 0
        %468 = vmatpush1.bf16.msra.mxu0 0
        %469 = vmatprep.subr.bf16.mxu0 0
        %470 = vmatpush1.bf16.msra.mxu0 0
        %471 = vmatprep.subr.bf16.mxu0 0
        %472 = vmatpush1.bf16.msra.mxu0 0
        %473 = vmatprep.mubr.bf16.mxu0 0
        %474 = vmatmul.mubr.bf16.gmra.mrb[0].mxu0 %v437
        %v475 = vpop.f32.mrb[0].mxu0
        %v476 = vadd.f32 %v417, %v475
        %v477 = vpop.f32.mrb[0].mxu0
        %v478 = vpop.f32.mrb[0].mxu0
        %v479 = vadd.f32 %v420, %v478
        %v480 = vpop.f32.mrb[0].mxu0
        %481 = vmatprep.mubr.bf16.mxu0 0
        %482 = vmatmul.mubr.bf16.gmra.mrb[0].mxu0 %v439
        %v483 = vpop.f32.mrb[0].mxu0
        %v484 = vadd.f32 %v425, %v483
        %v485 = vpop.f32.mrb[0].mxu0
        %v486 = vpop.f32.mrb[0].mxu0
        %v487 = vadd.f32 %v428, %v486
        %v488 = vpop.f32.mrb[0].mxu0
        %489 = vdwg.mxu0
        %v490 = vld [vmem:[%s4] sm:$0xf]
        %vm491 = vcmask 1046528
        %v492 = vrot.slane %v345, 1
        %v493 = vrot.slane %v346, 1
        %v494 = vsel %vm491, %v492, %v493
        %v495 = vrot.slane %v347, 1
        %v496 = vsel %vm491, %v493, %v495
        %vm497 = vcmask 64512
        %v499 = vsel %vm497, %v494, 0
        %v502 = vsel %vm497, %v496, 0
        %vm504 = vcmask 1043456
        %v506 = vsel %vm504, %v490, 0
        %508 = vmatprep.subr.bf16.mxu0 0
        %509 = vmatpush1.bf16.msra.mxu0 %v506
        %510 = vmatprep.subr.bf16.mxu0 0
        %511 = vmatpush1.bf16.msra.mxu0 0
        %512 = vmatprep.subr.bf16.mxu0 0
        %513 = vmatpush1.bf16.msra.mxu0 0
        %514 = vmatprep.subr.bf16.mxu0 0
        %515 = vmatpush1.bf16.msra.mxu0 0
        %516 = vmatprep.subr.bf16.mxu0 0
        %517 = vmatpush1.bf16.msra.mxu0 0
        %518 = vmatprep.subr.bf16.mxu0 0
        %519 = vmatpush1.bf16.msra.mxu0 0
        %520 = vmatprep.subr.bf16.mxu0 0
        %521 = vmatpush1.bf16.msra.mxu0 0
        %522 = vmatprep.subr.bf16.mxu0 0
        %523 = vmatpush1.bf16.msra.mxu0 0
        %524 = vmatprep.subr.bf16.mxu0 0
        %525 = vmatpush1.bf16.msra.mxu0 0
        %526 = vmatprep.subr.bf16.mxu0 0
        %527 = vmatpush1.bf16.msra.mxu0 0
        %528 = vmatprep.subr.bf16.mxu0 0
        %529 = vmatpush1.bf16.msra.mxu0 0
        %530 = vmatprep.subr.bf16.mxu0 0
        %531 = vmatpush1.bf16.msra.mxu0 0
        %532 = vmatprep.subr.bf16.mxu0 0
        %533 = vmatpush1.bf16.msra.mxu0 0
        %534 = vmatprep.subr.bf16.mxu0 0
        %535 = vmatpush1.bf16.msra.mxu0 0
        %536 = vmatprep.subr.bf16.mxu0 0
        %537 = vmatpush1.bf16.msra.mxu0 0
        %538 = vmatprep.subr.bf16.mxu0 0
        %539 = vmatpush1.bf16.msra.mxu0 0
        %540 = vmatprep.mubr.bf16.mxu0 0
        %541 = vmatmul.mubr.bf16.gmra.mrb[0].mxu0 %v499
        %v542 = vpop.f32.mrb[0].mxu0
        %v543 = vadd.f32 0.0, %v542
        %v544 = vpop.f32.mrb[0].mxu0
        %v545 = vpop.f32.mrb[0].mxu0
        %v546 = vadd.f32 0.0, %v545
        %v547 = vpop.f32.mrb[0].mxu0
        %548 = vmatprep.mubr.bf16.mxu0 0
        %549 = vmatmul.mubr.bf16.gmra.mrb[0].mxu0 %v502
        %v550 = vpop.f32.mrb[0].mxu0
        %v551 = vadd.f32 0.0, %v550
        %v552 = vpop.f32.mrb[0].mxu0
        %v553 = vpop.f32.mrb[0].mxu0
        %v554 = vadd.f32 0.0, %v553
        %v555 = vpop.f32.mrb[0].mxu0
        %556 = vdwg.mxu0
        %v557 = vadd.f32 %v476, %v543
        %v558 = vadd.f32 %v479, %v546
        %v559 = vadd.f32 %v484, %v551
        %v560 = vadd.f32 %v487, %v554
        %v561 = vld [vmem:[%s5] sm:$0x1]
        %v563 = vlaneseq
        %v564 = vshrl.u32 %v563, 7
        %v565 = vsub.s32 0, %v564
        %v566 = vrot.slane %v561, %v565
        %v568 = vadd.f32 %v557, %v566
        %v569 = vadd.f32 %v558, %v566
        %v570 = vadd.f32 %v559, %v566
        %v571 = vadd.f32 %v560, %v566
        %v572 = vsub.f32 0.0, %v568
        %v573 = vsub.f32 0.0, %v569
        %v574 = vsub.f32 0.0, %v570
        %v575 = vsub.f32 0.0, %v571
        %v576 = vmul.f32 %v572, 1.442695
        %v577 = vpow.pop %v576
        %v578 = vmul.f32 %v573, 1.442695
        %v579 = vpow.pop %v578
        %v580 = vmul.f32 %v574, 1.442695
        %v581 = vpow.pop %v580
        %v582 = vmul.f32 %v575, 1.442695
        %v583 = vpow.pop %v582
        %v584 = vadd.f32 %v577, 1.0
        %v585 = vadd.f32 %v579, 1.0
        %v586 = vadd.f32 %v581, 1.0
        %v587 = vadd.f32 %v583, 1.0
        %v588 = vrcp.pop %v584
        %v589 = vrcp.pop %v585
        %v590 = vrcp.pop %v586
        %v591 = vrcp.pop %v587
        %596 = vrot.lane.b32.xlu0 %v588, 64
        %v597 = vpop.permute.xlu0 %596
        %598 = vrot.lane.b32.xlu0 %v589, 64
        %v599 = vpop.permute.xlu0 %598
        %600 = vrot.lane.b32.xlu0 %v590, 64
        %v601 = vpop.permute.xlu0 %600
        %602 = vrot.lane.b32.xlu0 %v591, 64
        %v603 = vpop.permute.xlu0 %602
        %v608 = vmul.f32 %v568, %v597
        %v609 = vmul.f32 %v569, %v599
        %v610 = vmul.f32 %v570, %v601
        %v611 = vmul.f32 %v571, %v603
        %s612 = smul.u32 %s25, 32
        %v613 = vlaneseq
        %v614 = vshrl.u32 %v613, 7
        %v615 = vadd.s32 %v614, 8
        %v616 = vadd.s32 %v614, 16
        %v617 = vadd.s32 %v614, 24
        %v618 = vstv %s612
        %v619 = vadd.s32 %v618, %v614
        %v620 = vadd.s32 %v618, %v615
        %v621 = vadd.s32 %v618, %v616
        %v622 = vadd.s32 %v618, %v617
        %vm623 = vcmp.lt.s32.totalorder %v619, 126
        %vm624 = vcmp.lt.s32.totalorder %v620, 126
        %vm625 = vcmp.lt.s32.totalorder %v621, 126
        %vm626 = vcmp.lt.s32.totalorder %v622, 126
        %v627 = vsel %vm623, 1, 0
        %v628 = vsel %vm624, 1, 0
        %v629 = vsel %vm625, 1, 0
        %v630 = vsel %vm626, 1, 0
        %vm631 = vcmp.eq.s32.totalorder %v627, 1
        %vm632 = vcmp.eq.s32.totalorder %v628, 1
        %vm633 = vcmp.eq.s32.totalorder %v629, 1
        %vm634 = vcmp.eq.s32.totalorder %v630, 1
        %v635 = vsel %vm631, %v608, -inf
        %v636 = vsel %vm632, %v609, -inf
        %v637 = vsel %vm633, %v610, -inf
        %v638 = vsel %vm634, %v611, -inf
        %vm639 = vcmask 523264
        %v640 = vsel %vm639, %v635, -inf
        %v641 = vsel %vm639, %v636, -inf
        %v642 = vsel %vm639, %v637, -inf
        %v643 = vsel %vm639, %v638, -inf
        %v644 = vmax.f32 %v640, %v641
        %v645 = vmax.f32 %v642, %v643
        %v646 = vmax.f32 %v644, %v645
        %v647 = vrot.slane %v646, 4
        %v648 = vmax.f32 %v646, %v647
        %v649 = vrot.slane %v648, 2
        %v650 = vmax.f32 %v648, %v649
        %v651 = vrot.slane %v650, 1
        %v652 = vmax.f32 %v650, %v651
        %v653 = vld [vmem:[%s289] sm:$0x1]
        %v654 = vmax.f32 %v653, %v652
        %vm655 = vcmask 516096
        %656 = vst.msk [vmem:[%s289] sm:$0x1] %vm655, %v654
        %s657 = sand.u32 %s180, 1
        %s658 = scalar_lea.sflag [#allocation4], %s657
        %s659 = sand.u32 %s180, 1
        %s660 = scalar_lea.vmem [#allocation3], %s659
        // Predicated region
        $region49: #{tpu_custom_call.1} parent=43 // pred_check
          %p661 = pneg %p190
        $region50: #{tpu_custom_call.1} parent=43 // pred_check_branch
          %663 = sbr.rel (%p661) target = $region52
        $region51: #{tpu_custom_call.1} parent=43 // pred_region
          %s665 = ssub.s32 16, 16
          %666 = vsyncadd %s658, %s665
          %s667 = smul.addr %s24, 16
          %s668 = scalar_lea.hbm %s6, %s667
          %s670 = sshll.u32 %s660, 4
          %s671 = int_to_ptr.vmem [resolvable:$true] %s670
          %673 = dma.vmem_to_hbm [thread:$0]  %s671, 16, %s668, %s658
        $region52: #{tpu_custom_call.1} parent=43 // pred_fallthru
          _
      $region44: #{tpu_custom_call.1} parent=5 // pred_fallthru
        _
      %p674 = scmp.le.s32.totalorder 2, %s15
      // Predicated region
      $region53: #{tpu_custom_call.1} parent=5 // pred_check
        %p675 = pneg %p674
      $region54: #{tpu_custom_call.1} parent=5 // pred_check_branch
        %677 = sbr.rel (%p675) target = $region56
      $region55: #{tpu_custom_call.1} parent=5 // pred_region
        %s678 = ssub.s32 %s15, 2
        // Predicated region
        $region57: #{tpu_custom_call.1} parent=55 // pred_check
          %p679 = pneg %p196
        $region58: #{tpu_custom_call.1} parent=55 // pred_check_branch
          %681 = sbr.rel (%p679) target = $region60
        $region59: #{tpu_custom_call.1} parent=55 // pred_region
          %s682 = sand.u32 %s181, 1
          %s683 = scalar_lea.sflag [#allocation4], %s682
          %s684 = sand.u32 %s181, 1
          %s685 = scalar_lea.vmem [#allocation3], %s684
          %686 = dma.done %s683, 16
        $region60: #{tpu_custom_call.1} parent=55 // pred_fallthru
          _
      $region56: #{tpu_custom_call.1} parent=5 // pred_fallthru
        _
    $region6: #{tpu_custom_call.1} parent=1 // loop_footer
      %s19 = sadd.s32 1, %s15
    $region7: #{tpu_custom_call.1} parent=1 // loop_footer_branch
      %14 = sbr.rel target = $region3
    $region8: #{tpu_custom_call.1} parent=1 // loop_exit
      _
    %687 = vsyncpa [#allocation4], 1
    %s688 = scalar_lea.sflag [#allocation4], 1
    %689 = vsyncpa %s688, 1

</llo_original>
